<compile_context>
chip_gen: v7x
topology: tpu7x:2x2x1
jax: 0.10.0
libtpu: 0.0.40
codegen_flags: <defaults>
</compile_context>

<pallas_src>
import functools

import jax
import jax.numpy as jnp
from jax.experimental import pallas as pl
from jax.experimental.pallas import tpu as pltpu

LANE = 128
SUBLANE = 8


def _round_up(x, m):
    return ((x + m - 1) // m) * m


def _pad2d(a, rows, cols, dtype):
    a = a.astype(dtype)
    return jnp.pad(a, ((0, rows - a.shape[0]), (0, cols - a.shape[1])))


# --------------------------------------------------------------------------
# Kernels
# --------------------------------------------------------------------------
def gcn_layer1_kernel(a_ref, r_ref, w1_ref, b1_ref, w2_ref, hw_ref, acc_ref,
                      *, project_after_agg):
    """Accumulate A_hat @ R over K blocks; epilogue: (@W1) + b1, ReLU, @W2."""
    k = pl.program_id(1)

    @pl.when(k == 0)
    def _():
        acc_ref[...] = jnp.zeros_like(acc_ref)

    acc_ref[...] += jnp.dot(a_ref[...], r_ref[...],
                            preferred_element_type=jnp.float32)

    @pl.when(k == pl.num_programs(1) - 1)
    def _():
        agg = acc_ref[...]
        if project_after_agg:
            # (A_hat @ X) @ W1 : the N x N multiply ran at the narrow width F.
            agg = jnp.dot(agg.astype(jnp.bfloat16), w1_ref[...],
                          preferred_element_type=jnp.float32)
        h = jnp.maximum(agg + b1_ref[...], 0.0)          # bias + ReLU
        # dropout: inference semantics (training=False) => identity.
        # TODO(synk): training-mode dropout via pltpu.prng_seed / prng_random_bits.
        # Fuse layer-2's projection so the next adjacency multiply runs at width C.
        hw_ref[...] = jnp.dot(h.astype(jnp.bfloat16), w2_ref[...],
                              preferred_element_type=jnp.float32
                              ).astype(hw_ref.dtype)


def gcn_layer2_kernel(a_ref, hw_ref, b2_ref, o_ref, acc_ref, *, num_classes):
    """Accumulate A_hat @ (H@W2) over K blocks; epilogue: + b2, log_softmax."""
    k = pl.program_id(1)

    @pl.when(k == 0)
    def _():
        acc_ref[...] = jnp.zeros_like(acc_ref)

    acc_ref[...] += jnp.dot(a_ref[...], hw_ref[...],
                            preferred_element_type=jnp.float32)

    @pl.when(k == pl.num_programs(1) - 1)
    def _():
        z = acc_ref[...] + b2_ref[...]
        # Mask lane-padding columns so they do not perturb the softmax.
        col = jax.lax.broadcasted_iota(jnp.int32, z.shape, 1)
        z = jnp.where(col < num_classes, z, -1e30)
        m = jnp.max(z, axis=1, keepdims=True)
        s = z - m
        lse = jnp.log(jnp.sum(jnp.exp(s), axis=1, keepdims=True))
        o_ref[...] = s - lse


# --------------------------------------------------------------------------
# Wrapper
# --------------------------------------------------------------------------
def gcn_forward(a_hat, x, w1, b1, w2, b2):
    """Forward pass of the 2-layer GCN. Returns (N, C) float32 log-probs."""
    n = x.shape[0]
    f_in, hid = w1.shape
    n_classes = w2.shape[1]

    fp = _round_up(f_in, LANE)
    hp = _round_up(hid, LANE)
    cp = _round_up(n_classes, LANE)

    # Node-dimension tile plan: A_hat is (Np, Np); rows tiled by TM,
    # columns (the reduction axis) tiled by TK.
    if n > 512:
        np_ = _round_up(n, 512)
        tm, tk = 256, 512
    else:
        np_ = _round_up(n, LANE)
        tm, tk = LANE, np_
    nm, nk = np_ // tm, np_ // tk

    # ---- pad + cast operands (bf16 MXU inputs, f32 biases) ----
    a_p = _pad2d(a_hat, np_, np_, jnp.bfloat16)
    project_after_agg = f_in <= hid
    if project_after_agg:
        r = _pad2d(x, np_, fp, jnp.bfloat16)        # aggregate X first (width F)
        rw = fp
    else:
        # Project first: cold O(N*F*H) matmul; the hot O(N^2) path stays in Pallas.
        r = _pad2d(jnp.dot(x, w1), np_, hp, jnp.bfloat16)
        rw = hp
    w1_p = _pad2d(w1, fp, hp, jnp.bfloat16)
    b1_p = _pad2d(b1.reshape(1, -1), 1, hp, jnp.float32)
    w2_p = _pad2d(w2, hp, cp, jnp.bfloat16)
    b2_p = _pad2d(b2.reshape(1, -1), 1, cp, jnp.float32)

    dims = ("parallel", "arbitrary")

    # ---- layer 1 (+ fused H @ W2 projection) ----
    # VMEM budget: 2x double-buffered blocks (bf16) + f32 accumulator + headroom.
    l1_bytes = (2 * (tm * tk + tk * rw + fp * hp + hp * cp + tm * cp) * 2
                + 2 * hp * 4 + tm * rw * 4 + (8 << 20))
    hw1 = pl.pallas_call(
        functools.partial(gcn_layer1_kernel,
                          project_after_agg=project_after_agg),
        out_shape=jax.ShapeDtypeStruct((np_, cp), jnp.bfloat16),
        grid_spec=pltpu.PrefetchScalarGridSpec(
            num_scalar_prefetch=0,
            grid=(nm, nk),
            in_specs=[
                pl.BlockSpec((tm, tk), lambda i, k: (i, k)),   # A_hat tile
                pl.BlockSpec((tk, rw), lambda i, k: (k, 0)),   # X (or XW1) panel
                pl.BlockSpec((fp, hp), lambda i, k: (0, 0)),   # W1 (resident)
                pl.BlockSpec((1, hp), lambda i, k: (0, 0)),    # b1
                pl.BlockSpec((hp, cp), lambda i, k: (0, 0)),   # W2 (resident)
            ],
            out_specs=pl.BlockSpec((tm, cp), lambda i, k: (i, 0)),
            scratch_shapes=[pltpu.VMEM((tm, rw), jnp.float32)],
        ),
        compiler_params=pltpu.CompilerParams(
            dimension_semantics=dims,
            vmem_limit_bytes=int(l1_bytes),
        ),
    )(a_p, r, w1_p, b1_p, w2_p)

    # ---- layer 2: A_hat @ HW1 + b2, log_softmax ----
    l2_bytes = (2 * (tm * tk + tk * cp) * 2 + 2 * cp * 4
                + 2 * tm * cp * 4 + tm * cp * 4 + (8 << 20))
    out_p = pl.pallas_call(
        functools.partial(gcn_layer2_kernel, num_classes=n_classes),
        out_shape=jax.ShapeDtypeStruct((np_, cp), jnp.float32),
        grid_spec=pltpu.PrefetchScalarGridSpec(
            num_scalar_prefetch=0,
            grid=(nm, nk),
            in_specs=[
                pl.BlockSpec((tm, tk), lambda i, k: (i, k)),   # A_hat tile
                pl.BlockSpec((tk, cp), lambda i, k: (k, 0)),   # HW1 panel
                pl.BlockSpec((1, cp), lambda i, k: (0, 0)),    # b2
            ],
            out_specs=pl.BlockSpec((tm, cp), lambda i, k: (i, 0)),
            scratch_shapes=[pltpu.VMEM((tm, cp), jnp.float32)],
        ),
        compiler_params=pltpu.CompilerParams(
            dimension_semantics=dims,
            vmem_limit_bytes=int(l2_bytes),
        ),
    )(a_p, hw1, b2_p)

    return out_p[:n, :n_classes]


# --------------------------------------------------------------------------
# Plain-JAX glue: densify edge_index into the GCN-normalized adjacency
# --------------------------------------------------------------------------
def build_normalized_adjacency(edge_index, num_nodes):
    """Dense D^-1/2 (A + I) D^-1/2 matching torch_geometric GCNConv defaults.

    Self-loops are only added to nodes that do not already have one
    (add_remaining_self_loops semantics).
    """
    src, dst = edge_index[0], edge_index[1]
    a = jnp.zeros((num_nodes, num_nodes), jnp.float32)
    a = a.at[dst, src].add(1.0)              # message j -> i lands in row i
    has_self = jnp.diagonal(a) > 0
    a = a + jnp.diag(jnp.where(has_self, 0.0, 1.0))
    deg = jnp.sum(a, axis=1)
    d_inv_sqrt = jnp.where(deg > 0, jax.lax.rsqrt(deg), 0.0)
    return d_inv_sqrt[:, None] * a * d_inv_sqrt[None, :]


def glorot(key, shape):
    fan_in, fan_out = shape
    limit = jnp.sqrt(6.0 / (fan_in + fan_out))
    return jax.random.uniform(key, shape, jnp.float32, -limit, limit)


if __name__ == "__main__":
    # Small, deterministic synthetic problem.
    N = 16            # nodes
    F_IN = 8          # num_features
    HID = 32          # hidden_dim
    C = 4             # num_classes
    E = 40            # directed edges

    key = jax.random.PRNGKey(0)
    k_x, k_e, k_w1, k_w2 = jax.random.split(key, 4)

    x = jax.random.normal(k_x, (N, F_IN), jnp.float32)
    edge_index = jax.random.randint(k_e, (2, E), 0, N)

    # Deterministic parameter init (glorot weights, zero bias) — no checkpoint.
    w1 = glorot(k_w1, (F_IN, HID))
    b1 = jnp.zeros((1, HID), jnp.float32)
    w2 = glorot(k_w2, (HID, C))
    b2 = jnp.zeros((1, C), jnp.float32)

    a_hat = build_normalized_adjacency(edge_index, N)

    out = gcn_forward(a_hat, x, w1, b1, w2, b2)
    jax.block_until_ready(out)

    # pure-JAX f32 reference (bf16 MXU inputs => loose tolerance)
    h_ref = jnp.maximum(a_hat @ x @ w1 + b1, 0.0)
    z_ref = a_hat @ h_ref @ w2 + b2
    ref = jax.nn.log_softmax(z_ref, axis=1)

    assert out.shape == (N, C)
    assert jnp.allclose(jnp.sum(jnp.exp(out), axis=1), 1.0, atol=1e-3)
    assert jnp.allclose(out, ref, atol=5e-2, rtol=5e-2), float(
        jnp.max(jnp.abs(out - ref)))

    print("KERNEL_OK")
</pallas_src>

<mosaic_0001>
module attributes {stable_mosaic.version = 11 : i64} {
  func.func @gcn_layer1_kernel(%arg0: i32, %arg1: i32, %arg2: memref<128x128xbf16, #tpu.memory_space<vmem>>, %arg3: memref<128x128xbf16, #tpu.memory_space<vmem>>, %arg4: memref<128x128xbf16, #tpu.memory_space<vmem>>, %arg5: memref<1x128xf32, #tpu.memory_space<vmem>>, %arg6: memref<128x128xbf16, #tpu.memory_space<vmem>>, %arg7: memref<128x128xbf16, #tpu.memory_space<vmem>>, %arg8: memref<128x128xf32, #tpu.memory_space<vmem>>) attributes {dimension_semantics = [#tpu.dimension_semantics<parallel>, #tpu.dimension_semantics<arbitrary>], iteration_bounds = array<i64: 1, 1>, scalar_prefetch = 0 : i64, scratch_operands = 1 : i64, tpu.core_type = #tpu.core_type<tc>, window_params = [{transform_indices = @transform_0, window_bounds = array<i64: 128, 128>}, {transform_indices = @transform_1, window_bounds = array<i64: 128, 128>}, {pipeline_mode = #tpu.pipeline_mode<synchronous>, transform_indices = @transform_2, window_bounds = array<i64: 128, 128>}, {pipeline_mode = #tpu.pipeline_mode<synchronous>, transform_indices = @transform_3, window_bounds = array<i64: 1, 128>}, {pipeline_mode = #tpu.pipeline_mode<synchronous>, transform_indices = @transform_4, window_bounds = array<i64: 128, 128>}, {transform_indices = @transform_5, window_bounds = array<i64: 128, 128>}]} {
    %c0_i32 = arith.constant 0 : i32
    %0 = arith.cmpi eq, %arg1, %c0_i32 : i32
    %1 = arith.extui %0 : i1 to i32
    %c0_i32_0 = arith.constant 0 : i32
    %2 = arith.cmpi ne, %1, %c0_i32_0 : i32
    scf.if %2 {
      %cst_10 = arith.constant 0.000000e+00 : f32
      %12 = vector.broadcast %cst_10 : f32 to vector<128x128xf32>
      %c0_11 = arith.constant 0 : index
      %c0_12 = arith.constant 0 : index
      %13 = vector.load %arg8[%c0_11, %c0_12] : memref<128x128xf32, #tpu.memory_space<vmem>>, vector<128x128xf32>
      tpu.vector_store %arg8[%c0_11, %c0_12], %12 {strides = array<i32>} : memref<128x128xf32, #tpu.memory_space<vmem>>, vector<128x128xf32>,
    } else {
    }
    %c0 = arith.constant 0 : index
    %c0_1 = arith.constant 0 : index
    %3 = vector.load %arg8[%c0, %c0_1] : memref<128x128xf32, #tpu.memory_space<vmem>>, vector<128x128xf32>
    %c0_2 = arith.constant 0 : index
    %c0_3 = arith.constant 0 : index
    %4 = vector.load %arg2[%c0_2, %c0_3] : memref<128x128xbf16, #tpu.memory_space<vmem>>, vector<128x128xbf16>
    %c0_4 = arith.constant 0 : index
    %c0_5 = arith.constant 0 : index
    %5 = vector.load %arg3[%c0_4, %c0_5] : memref<128x128xbf16, #tpu.memory_space<vmem>>, vector<128x128xbf16>
    %cst = arith.constant dense<0.000000e+00> : vector<128x128xf32>
    %6 = tpu.matmul %4, %5, %cst {dimension_numbers = #tpu.dot_dimension_numbers<[1], [0], [0], [1], [0, 0, 1, 1], [], []>} : vector<128x128xbf16>, vector<128x128xbf16>, vector<128x128xf32> -> vector<128x128xf32>
    %7 = arith.addf %3, %6 : vector<128x128xf32>
    %c0_6 = arith.constant 0 : index
    %c0_7 = arith.constant 0 : index
    %8 = vector.load %arg8[%c0_6, %c0_7] : memref<128x128xf32, #tpu.memory_space<vmem>>, vector<128x128xf32>
    tpu.vector_store %arg8[%c0_6, %c0_7], %7 {strides = array<i32>} : memref<128x128xf32, #tpu.memory_space<vmem>>, vector<128x128xf32>,
    %c0_i32_8 = arith.constant 0 : i32
    %9 = arith.cmpi eq, %arg1, %c0_i32_8 : i32
    %10 = arith.extui %9 : i1 to i32
    %c0_i32_9 = arith.constant 0 : i32
    %11 = arith.cmpi ne, %10, %c0_i32_9 : i32
    scf.if %11 {
      %c0_10 = arith.constant 0 : index
      %c0_11 = arith.constant 0 : index
      %12 = vector.load %arg8[%c0_10, %c0_11] : memref<128x128xf32, #tpu.memory_space<vmem>>, vector<128x128xf32>
      %13 = arith.truncf %12 : vector<128x128xf32> to vector<128x128xbf16>
      %c0_12 = arith.constant 0 : index
      %c0_13 = arith.constant 0 : index
      %14 = vector.load %arg4[%c0_12, %c0_13] : memref<128x128xbf16, #tpu.memory_space<vmem>>, vector<128x128xbf16>
      %cst_14 = arith.constant dense<0.000000e+00> : vector<128x128xf32>
      %15 = tpu.matmul %13, %14, %cst_14 {dimension_numbers = #tpu.dot_dimension_numbers<[1], [0], [0], [1], [0, 0, 1, 1], [], []>} : vector<128x128xbf16>, vector<128x128xbf16>, vector<128x128xf32> -> vector<128x128xf32>
      %c0_15 = arith.constant 0 : index
      %c0_16 = arith.constant 0 : index
      %16 = vector.load %arg5[%c0_15, %c0_16] : memref<1x128xf32, #tpu.memory_space<vmem>>, vector<1x128xf32>
      %17 = vector.broadcast %16 : vector<1x128xf32> to vector<128x128xf32>
      %18 = arith.addf %15, %17 : vector<128x128xf32>
      %cst_17 = arith.constant 0.000000e+00 : f32
      %19 = vector.broadcast %cst_17 : f32 to vector<128x128xf32>
      %20 = arith.maximumf %18, %19 : vector<128x128xf32>
      %21 = arith.truncf %20 : vector<128x128xf32> to vector<128x128xbf16>
      %c0_18 = arith.constant 0 : index
      %c0_19 = arith.constant 0 : index
      %22 = vector.load %arg6[%c0_18, %c0_19] : memref<128x128xbf16, #tpu.memory_space<vmem>>, vector<128x128xbf16>
      %cst_20 = arith.constant dense<0.000000e+00> : vector<128x128xf32>
      %23 = tpu.matmul %21, %22, %cst_20 {dimension_numbers = #tpu.dot_dimension_numbers<[1], [0], [0], [1], [0, 0, 1, 1], [], []>} : vector<128x128xbf16>, vector<128x128xbf16>, vector<128x128xf32> -> vector<128x128xf32>
      %24 = arith.truncf %23 : vector<128x128xf32> to vector<128x128xbf16>
      %c0_21 = arith.constant 0 : index
      %c0_22 = arith.constant 0 : index
      %25 = vector.load %arg7[%c0_21, %c0_22] : memref<128x128xbf16, #tpu.memory_space<vmem>>, vector<128x128xbf16>
      tpu.vector_store %arg7[%c0_21, %c0_22], %24 {strides = array<i32>} : memref<128x128xbf16, #tpu.memory_space<vmem>>, vector<128x128xbf16>,
    } else {
    }
    return
  }
  func.func @transform_0(%arg0: i32, %arg1: i32) -> (i32, i32) {
    %c0_i32 = arith.constant 0 : i32
    return %arg0, %arg1 : i32, i32
  }
  func.func @transform_1(%arg0: i32, %arg1: i32) -> (i32, i32) {
    %c0_i32 = arith.constant 0 : i32
    %c0_i32_0 = arith.constant 0 : i32
    return %arg1, %c0_i32 : i32, i32
  }
  func.func @transform_2(%arg0: i32, %arg1: i32) -> (i32, i32) {
    %c0_i32 = arith.constant 0 : i32
    %c0_i32_0 = arith.constant 0 : i32
    %c0_i32_1 = arith.constant 0 : i32
    return %c0_i32, %c0_i32_0 : i32, i32
  }
  func.func @transform_3(%arg0: i32, %arg1: i32) -> (i32, i32) {
    %c0_i32 = arith.constant 0 : i32
    %c0_i32_0 = arith.constant 0 : i32
    %c0_i32_1 = arith.constant 0 : i32
    return %c0_i32, %c0_i32_0 : i32, i32
  }
  func.func @transform_4(%arg0: i32, %arg1: i32) -> (i32, i32) {
    %c0_i32 = arith.constant 0 : i32
    %c0_i32_0 = arith.constant 0 : i32
    %c0_i32_1 = arith.constant 0 : i32
    return %c0_i32, %c0_i32_0 : i32, i32
  }
  func.func @transform_5(%arg0: i32, %arg1: i32) -> (i32, i32) {
    %c0_i32 = arith.constant 0 : i32
    %c0_i32_0 = arith.constant 0 : i32
    return %arg0, %c0_i32 : i32, i32
  }
}

</mosaic_0001>

<llo_original>
// kernel: tpu_custom_call.1
$region0: #{tpu_custom_call.1}
  #allocation0 [shape = 'u32[]', space=smem, size = 0x4, offset = 0x4, fixed_abs, tag = 'smem constant byte address 0x4 - core index']
  #allocation1 [shape = 'u32[144,128]{1,0:T(1,128)}', space=vmem, size = 0x12000, scoped, tag = 'internal scratch']
  #allocation2 [shape = 'f32[128,128]{1,0:T(8,128)}', space=vmem, size = 0x10000, scoped, tag = 'scratch operand']
  %s0 = inlined_call_operand.hbm [shape: bf16[128,128], index: 0, kind: input, shape index: {}]
  %s1 = inlined_call_operand.hbm [shape: bf16[128,128], index: 1, kind: input, shape index: {}]
  %s2 = inlined_call_operand.hbm [shape: bf16[128,128], index: 2, kind: input, shape index: {}]
  %s3 = inlined_call_operand.vmem [shape: f32[1,128], index: 3, kind: input, shape index: {}]
  %s4 = inlined_call_operand.hbm [shape: bf16[128,128], index: 4, kind: input, shape index: {}]
  %s5 = inlined_call_operand.hbm [shape: bf16[128,128], index: 5, kind: output, shape index: {}]
  %s6 = sld [smem:[#allocation0]]
  $region54: #{tpu_custom_call.1} parent=0
    _
  %s8 = ssub.s32 1, %s6
  %s9 = scalar_select 0, %s8, %s6
  $region1: #{tpu_custom_call.1} parent=0
    #allocation3 [shape = 'u8[32768]{0}', space=vmem, size = 0x8000, scoped, tag = 'input window, operand 0, single buffered']
    #allocation4 [shape = 's32[1]{0}', space=sflag, size = 0x4, scoped, tag = 'scoped memory for tpu_custom_call.1']
    #allocation5 [shape = 's32[1]{0}', space=sflag, size = 0x4, scoped, tag = 'scoped memory for tpu_custom_call.1']
    #allocation6 [shape = 'u8[32768]{0}', space=vmem, size = 0x8000, scoped, tag = 'input window, operand 1, single buffered']
    #allocation7 [shape = 's32[1]{0}', space=sflag, size = 0x4, scoped, tag = 'scoped memory for tpu_custom_call.1']
    #allocation8 [shape = 'u8[32768]{0}', space=vmem, size = 0x8000, scoped, tag = 'input window, operand 2, single buffered']
    #allocation9 [shape = 'u8[32768]{0}', space=vmem, size = 0x8000, scoped, tag = 'input window, operand 4, single buffered']
    #allocation10 [shape = 's32[1]{0}', space=sflag, size = 0x4, scoped, tag = 'scoped memory for tpu_custom_call.1']
    #allocation11 [shape = 'u8[32768]{0}', space=vmem, size = 0x8000, scoped, tag = 'output window, operand 0, single buffered']
    %10 = vsyncpa [#allocation4], 0
    %11 = vsyncpa [#allocation7], 0
    %12 = vsyncpa [#allocation10], 0
    %13 = vsyncpa [#allocation5], 0
    // Predicated region
    $region2: #{tpu_custom_call.1} parent=1 // pred_check
      _
    $region3: #{tpu_custom_call.1} parent=1 // pred_check_branch
      %15 = sbr.rel (0) target = $region5
    $region4: #{tpu_custom_call.1} parent=1 // pred_region
      %s17 = ssub.s32 1024, 1024
      %18 = vsyncadd [#allocation4], %s17
      %s19 = sshll.u32 [#allocation3], 4
      %s20 = int_to_ptr.vmem [resolvable:$true] %s19
      %25 = dma.hbm_to_vmem [thread:$0]  %s0, 1024, %s20, [#allocation4], 64, 64, 4
    $region5: #{tpu_custom_call.1} parent=1 // pred_fallthru
      _
    // Predicated region
    $region6: #{tpu_custom_call.1} parent=1 // pred_check
      _
    $region7: #{tpu_custom_call.1} parent=1 // pred_check_branch
      %27 = sbr.rel (0) target = $region9
    $region8: #{tpu_custom_call.1} parent=1 // pred_region
      %s29 = ssub.s32 1024, 1024
      %30 = vsyncadd [#allocation7], %s29
      %s31 = sshll.u32 [#allocation6], 4
      %s32 = int_to_ptr.vmem [resolvable:$true] %s31
      %37 = dma.hbm_to_vmem [thread:$0]  %s1, 1024, %s32, [#allocation7], 64, 64, 4
    $region9: #{tpu_custom_call.1} parent=1 // pred_fallthru
      _
    // Predicated region
    $region10: #{tpu_custom_call.1} parent=1 // pred_check
      _
    $region11: #{tpu_custom_call.1} parent=1 // pred_check_branch
      %39 = sbr.rel (0) target = $region13
    $region12: #{tpu_custom_call.1} parent=1 // pred_region
      %s41 = ssub.s32 1024, 1024
      %42 = vsyncadd [#allocation7], %s41
      %s43 = sshll.u32 [#allocation8], 4
      %s44 = int_to_ptr.vmem [resolvable:$true] %s43
      %49 = dma.hbm_to_vmem [thread:$0]  %s2, 1024, %s44, [#allocation7], 64, 64, 4
    $region13: #{tpu_custom_call.1} parent=1 // pred_fallthru
      _
    // Predicated region
    $region14: #{tpu_custom_call.1} parent=1 // pred_check
      _
    $region15: #{tpu_custom_call.1} parent=1 // pred_check_branch
      %51 = sbr.rel (0) target = $region17
    $region16: #{tpu_custom_call.1} parent=1 // pred_region
      _
    $region17: #{tpu_custom_call.1} parent=1 // pred_fallthru
      _
    // Predicated region
    $region18: #{tpu_custom_call.1} parent=1 // pred_check
      _
    $region19: #{tpu_custom_call.1} parent=1 // pred_check_branch
      %53 = sbr.rel (0) target = $region21
    $region20: #{tpu_custom_call.1} parent=1 // pred_region
      %s55 = ssub.s32 1024, 1024
      %56 = vsyncadd [#allocation10], %s55
      %s57 = sshll.u32 [#allocation9], 4
      %s58 = int_to_ptr.vmem [resolvable:$true] %s57
      %63 = dma.hbm_to_vmem [thread:$0]  %s4, 1024, %s58, [#allocation10], 64, 64, 4
    $region21: #{tpu_custom_call.1} parent=1 // pred_fallthru
      _
    // Predicated region
    $region22: #{tpu_custom_call.1} parent=1 // pred_check
      _
    $region23: #{tpu_custom_call.1} parent=1 // pred_check_branch
      %65 = sbr.rel (0) target = $region25
    $region24: #{tpu_custom_call.1} parent=1 // pred_region
      %66 = dma.done [#allocation4], 1024
    $region25: #{tpu_custom_call.1} parent=1 // pred_fallthru
      _
    // Predicated region
    $region26: #{tpu_custom_call.1} parent=1 // pred_check
      _
    $region27: #{tpu_custom_call.1} parent=1 // pred_check_branch
      %68 = sbr.rel (0) target = $region29
    $region28: #{tpu_custom_call.1} parent=1 // pred_region
      %69 = dma.done [#allocation7], 1024
    $region29: #{tpu_custom_call.1} parent=1 // pred_fallthru
      _
    // Predicated region
    $region30: #{tpu_custom_call.1} parent=1 // pred_check
      _
    $region31: #{tpu_custom_call.1} parent=1 // pred_check_branch
      %71 = sbr.rel (0) target = $region33
    $region32: #{tpu_custom_call.1} parent=1 // pred_region
      %72 = dma.done [#allocation7], 1024
    $region33: #{tpu_custom_call.1} parent=1 // pred_fallthru
      _
    // Predicated region
    $region34: #{tpu_custom_call.1} parent=1 // pred_check
      _
    $region35: #{tpu_custom_call.1} parent=1 // pred_check_branch
      %74 = sbr.rel (0) target = $region37
    $region36: #{tpu_custom_call.1} parent=1 // pred_region
      %75 = dma.done [#allocation10], 1024
    $region37: #{tpu_custom_call.1} parent=1 // pred_fallthru
      _
    %p77 = scmp.eq.s32.totalorder 0, 0
    // Predicated region
    $region38: #{tpu_custom_call.1} parent=1 // pred_check
      %p78 = pneg %p77
    $region39: #{tpu_custom_call.1} parent=1 // pred_check_branch
      %80 = sbr.rel (%p78) target = $region41
    $region40: #{tpu_custom_call.1} parent=1 // pred_region
      %81 = vst [vmem:[#allocation2] sm:$0xff] 0.0
      %82 = vst [vmem:[#allocation2 + $0x8] sm:$0xff] 0.0
      %83 = vst [vmem:[#allocation2 + $0x10] sm:$0xff] 0.0
      %84 = vst [vmem:[#allocation2 + $0x18] sm:$0xff] 0.0
      %85 = vst [vmem:[#allocation2 + $0x20] sm:$0xff] 0.0
      %86 = vst [vmem:[#allocation2 + $0x28] sm:$0xff] 0.0
      %87 = vst [vmem:[#allocation2 + $0x30] sm:$0xff] 0.0
      %88 = vst [vmem:[#allocation2 + $0x38] sm:$0xff] 0.0
      %89 = vst [vmem:[#allocation2 + $0x40] sm:$0xff] 0.0
      %90 = vst [vmem:[#allocation2 + $0x48] sm:$0xff] 0.0
      %91 = vst [vmem:[#allocation2 + $0x50] sm:$0xff] 0.0
      %92 = vst [vmem:[#allocation2 + $0x58] sm:$0xff] 0.0
      %93 = vst [vmem:[#allocation2 + $0x60] sm:$0xff] 0.0
      %94 = vst [vmem:[#allocation2 + $0x68] sm:$0xff] 0.0
      %95 = vst [vmem:[#allocation2 + $0x70] sm:$0xff] 0.0
      %96 = vst [vmem:[#allocation2 + $0x78] sm:$0xff] 0.0
    $region41: #{tpu_custom_call.1} parent=1 // pred_fallthru
      _
    %v97 = vld [vmem:[#allocation2] sm:$0xff]
    %v98 = vld [vmem:[#allocation2 + $0x8] sm:$0xff]
    %v99 = vld [vmem:[#allocation2 + $0x10] sm:$0xff]
    %v100 = vld [vmem:[#allocation2 + $0x18] sm:$0xff]
    %v101 = vld [vmem:[#allocation2 + $0x20] sm:$0xff]
    %v102 = vld [vmem:[#allocation2 + $0x28] sm:$0xff]
    %v103 = vld [vmem:[#allocation2 + $0x30] sm:$0xff]
    %v104 = vld [vmem:[#allocation2 + $0x38] sm:$0xff]
    %v105 = vld [vmem:[#allocation2 + $0x40] sm:$0xff]
    %v106 = vld [vmem:[#allocation2 + $0x48] sm:$0xff]
    %v107 = vld [vmem:[#allocation2 + $0x50] sm:$0xff]
    %v108 = vld [vmem:[#allocation2 + $0x58] sm:$0xff]
    %v109 = vld [vmem:[#allocation2 + $0x60] sm:$0xff]
    %v110 = vld [vmem:[#allocation2 + $0x68] sm:$0xff]
    %v111 = vld [vmem:[#allocation2 + $0x70] sm:$0xff]
    %v112 = vld [vmem:[#allocation2 + $0x78] sm:$0xff]
    %v113 = vld [vmem:[#allocation3] sm:$0xf]
    %v114 = vld [vmem:[#allocation3 + $0x4] sm:$0xf]
    %v115 = vld [vmem:[#allocation3 + $0x8] sm:$0xf]
    %v116 = vld [vmem:[#allocation3 + $0xc] sm:$0xf]
    %v117 = vld [vmem:[#allocation3 + $0x10] sm:$0xf]
    %v118 = vld [vmem:[#allocation3 + $0x14] sm:$0xf]
    %v119 = vld [vmem:[#allocation3 + $0x18] sm:$0xf]
    %v120 = vld [vmem:[#allocation3 + $0x1c] sm:$0xf]
    %v121 = vld [vmem:[#allocation3 + $0x20] sm:$0xf]
    %v122 = vld [vmem:[#allocation3 + $0x24] sm:$0xf]
    %v123 = vld [vmem:[#allocation3 + $0x28] sm:$0xf]
    %v124 = vld [vmem:[#allocation3 + $0x2c] sm:$0xf]
    %v125 = vld [vmem:[#allocation3 + $0x30] sm:$0xf]
    %v126 = vld [vmem:[#allocation3 + $0x34] sm:$0xf]
    %v127 = vld [vmem:[#allocation3 + $0x38] sm:$0xf]
    %v128 = vld [vmem:[#allocation3 + $0x3c] sm:$0xf]
    %v129 = vld [vmem:[#allocation6] sm:$0xf]
    %v130 = vld [vmem:[#allocation6 + $0x4] sm:$0xf]
    %v131 = vld [vmem:[#allocation6 + $0x8] sm:$0xf]
    %v132 = vld [vmem:[#allocation6 + $0xc] sm:$0xf]
    %v133 = vld [vmem:[#allocation6 + $0x10] sm:$0xf]
    %v134 = vld [vmem:[#allocation6 + $0x14] sm:$0xf]
    %v135 = vld [vmem:[#allocation6 + $0x18] sm:$0xf]
    %v136 = vld [vmem:[#allocation6 + $0x1c] sm:$0xf]
    %v137 = vld [vmem:[#allocation6 + $0x20] sm:$0xf]
    %v138 = vld [vmem:[#allocation6 + $0x24] sm:$0xf]
    %v139 = vld [vmem:[#allocation6 + $0x28] sm:$0xf]
    %v140 = vld [vmem:[#allocation6 + $0x2c] sm:$0xf]
    %v141 = vld [vmem:[#allocation6 + $0x30] sm:$0xf]
    %v142 = vld [vmem:[#allocation6 + $0x34] sm:$0xf]
    %v143 = vld [vmem:[#allocation6 + $0x38] sm:$0xf]
    %v144 = vld [vmem:[#allocation6 + $0x3c] sm:$0xf]
    %v161 = vunpack.c.l.b16 %v113
    %v162 = vunpack.c.l.b16 %v114
    %v163 = vunpack.c.l.b16 %v115
    %v164 = vunpack.c.l.b16 %v116
    %v165 = vunpack.c.l.b16 %v117
    %v166 = vunpack.c.l.b16 %v118
    %v167 = vunpack.c.l.b16 %v119
    %v168 = vunpack.c.l.b16 %v120
    %v169 = vunpack.c.l.b16 %v121
    %v170 = vunpack.c.l.b16 %v122
    %v171 = vunpack.c.l.b16 %v123
    %v172 = vunpack.c.l.b16 %v124
    %v173 = vunpack.c.l.b16 %v125
    %v174 = vunpack.c.l.b16 %v126
    %v175 = vunpack.c.l.b16 %v127
    %v176 = vunpack.c.l.b16 %v128
    %v177 = vpack.c.b16 %v162, %v161
    %v178 = vpack.c.b16 %v164, %v163
    %v179 = vpack.c.b16 %v166, %v165
    %v180 = vpack.c.b16 %v168, %v167
    %v181 = vpack.c.b16 %v170, %v169
    %v182 = vpack.c.b16 %v172, %v171
    %v183 = vpack.c.b16 %v174, %v173
    %v184 = vpack.c.b16 %v176, %v175
    %v209 = vunpack.c.l.b16 %v129
    %v210 = vunpack.c.l.b16 %v130
    %v211 = vunpack.c.l.b16 %v131
    %v212 = vunpack.c.l.b16 %v132
    %v213 = vunpack.c.l.b16 %v133
    %v214 = vunpack.c.l.b16 %v134
    %v215 = vunpack.c.l.b16 %v135
    %v216 = vunpack.c.l.b16 %v136
    %v217 = vunpack.c.l.b16 %v137
    %v218 = vunpack.c.l.b16 %v138
    %v219 = vunpack.c.l.b16 %v139
    %v220 = vunpack.c.l.b16 %v140
    %v221 = vunpack.c.l.b16 %v141
    %v222 = vunpack.c.l.b16 %v142
    %v223 = vunpack.c.l.b16 %v143
    %v224 = vunpack.c.l.b16 %v144
    %v225 = vpack.c.b16 %v210, %v209
    %v226 = vpack.c.b16 %v212, %v211
    %v227 = vpack.c.b16 %v214, %v213
    %v228 = vpack.c.b16 %v216, %v215
    %v229 = vpack.c.b16 %v218, %v217
    %v230 = vpack.c.b16 %v220, %v219
    %v231 = vpack.c.b16 %v222, %v221
    %v232 = vpack.c.b16 %v224, %v223
    %241 = vmatprep.subr.bf16.mxu0 0
    %242 = vmatpush1.bf16.msra.mxu0 %v225
    %243 = vmatprep.subr.bf16.mxu0 0
    %244 = vmatpush1.bf16.msra.mxu0 %v226
    %245 = vmatprep.subr.bf16.mxu0 0
    %246 = vmatpush1.bf16.msra.mxu0 %v227
    %247 = vmatprep.subr.bf16.mxu0 0
    %248 = vmatpush1.bf16.msra.mxu0 %v228
    %249 = vmatprep.subr.bf16.mxu0 0
    %250 = vmatpush1.bf16.msra.mxu0 %v229
    %251 = vmatprep.subr.bf16.mxu0 0
    %252 = vmatpush1.bf16.msra.mxu0 %v230
    %253 = vmatprep.subr.bf16.mxu0 0
    %254 = vmatpush1.bf16.msra.mxu0 %v231
    %255 = vmatprep.subr.bf16.mxu0 0
    %256 = vmatpush1.bf16.msra.mxu0 %v232
    %257 = vmatprep.subr.bf16.mxu0 0
    %258 = vmatpush1.bf16.msra.mxu0 0
    %259 = vmatprep.subr.bf16.mxu0 0
    %260 = vmatpush1.bf16.msra.mxu0 0
    %261 = vmatprep.subr.bf16.mxu0 0
    %262 = vmatpush1.bf16.msra.mxu0 0
    %263 = vmatprep.subr.bf16.mxu0 0
    %264 = vmatpush1.bf16.msra.mxu0 0
    %265 = vmatprep.subr.bf16.mxu0 0
    %266 = vmatpush1.bf16.msra.mxu0 0
    %267 = vmatprep.subr.bf16.mxu0 0
    %268 = vmatpush1.bf16.msra.mxu0 0
    %269 = vmatprep.subr.bf16.mxu0 0
    %270 = vmatpush1.bf16.msra.mxu0 0
    %271 = vmatprep.subr.bf16.mxu0 0
    %272 = vmatpush1.bf16.msra.mxu0 0
    %273 = vmatprep.mubr.bf16.mxu0 0
    %274 = vmatmul.mubr.bf16.gmra.mrb[0].mxu0 %v177
    %v275 = vpop.f32.mrb[0].mxu0
    %v276 = vadd.f32 0.0, %v275
    %v277 = vpop.f32.mrb[0].mxu0
    %v278 = vpop.f32.mrb[0].mxu0
    %v279 = vadd.f32 0.0, %v278
    %v280 = vpop.f32.mrb[0].mxu0
    %281 = vmatprep.mubr.bf16.mxu0 0
    %282 = vmatmul.mubr.bf16.gmra.mrb[0].mxu0 %v178
    %v283 = vpop.f32.mrb[0].mxu0
    %v284 = vadd.f32 0.0, %v283
    %v285 = vpop.f32.mrb[0].mxu0
    %v286 = vpop.f32.mrb[0].mxu0
    %v287 = vadd.f32 0.0, %v286
    %v288 = vpop.f32.mrb[0].mxu0
    %289 = vmatprep.mubr.bf16.mxu0 0
    %290 = vmatmul.mubr.bf16.gmra.mrb[0].mxu0 %v179
    %v291 = vpop.f32.mrb[0].mxu0
    %v292 = vadd.f32 0.0, %v291
    %v293 = vpop.f32.mrb[0].mxu0
    %v294 = vpop.f32.mrb[0].mxu0
    %v295 = vadd.f32 0.0, %v294
    %v296 = vpop.f32.mrb[0].mxu0
    %297 = vmatprep.mubr.bf16.mxu0 0
    %298 = vmatmul.mubr.bf16.gmra.mrb[0].mxu0 %v180
    %v299 = vpop.f32.mrb[0].mxu0
    %v300 = vadd.f32 0.0, %v299
    %v301 = vpop.f32.mrb[0].mxu0
    %v302 = vpop.f32.mrb[0].mxu0
    %v303 = vadd.f32 0.0, %v302
    %v304 = vpop.f32.mrb[0].mxu0
    %305 = vmatprep.mubr.bf16.mxu0 0
    %306 = vmatmul.mubr.bf16.gmra.mrb[0].mxu0 %v181
    %v307 = vpop.f32.mrb[0].mxu0
    %v308 = vadd.f32 0.0, %v307
    %v309 = vpop.f32.mrb[0].mxu0
    %v310 = vpop.f32.mrb[0].mxu0
    %v311 = vadd.f32 0.0, %v310
    %v312 = vpop.f32.mrb[0].mxu0
    %313 = vmatprep.mubr.bf16.mxu0 0
    %314 = vmatmul.mubr.bf16.gmra.mrb[0].mxu0 %v182
    %v315 = vpop.f32.mrb[0].mxu0
    %v316 = vadd.f32 0.0, %v315
    %v317 = vpop.f32.mrb[0].mxu0
    %v318 = vpop.f32.mrb[0].mxu0
    %v319 = vadd.f32 0.0, %v318
    %v320 = vpop.f32.mrb[0].mxu0
    %321 = vmatprep.mubr.bf16.mxu0 0
    %322 = vmatmul.mubr.bf16.gmra.mrb[0].mxu0 %v183
    %v323 = vpop.f32.mrb[0].mxu0
    %v324 = vadd.f32 0.0, %v323
    %v325 = vpop.f32.mrb[0].mxu0
    %v326 = vpop.f32.mrb[0].mxu0
    %v327 = vadd.f32 0.0, %v326
    %v328 = vpop.f32.mrb[0].mxu0
    %329 = vmatprep.mubr.bf16.mxu0 0
    %330 = vmatmul.mubr.bf16.gmra.mrb[0].mxu0 %v184
    %v331 = vpop.f32.mrb[0].mxu0
    %v332 = vadd.f32 0.0, %v331
    %v333 = vpop.f32.mrb[0].mxu0
    %v334 = vpop.f32.mrb[0].mxu0
    %v335 = vadd.f32 0.0, %v334
    %v336 = vpop.f32.mrb[0].mxu0
    %337 = vdwg.mxu0
    %v338 = vadd.f32 %v97, %v276
    %v339 = vadd.f32 %v98, %v279
    %v340 = vadd.f32 %v99, %v284
    %v341 = vadd.f32 %v100, %v287
    %v342 = vadd.f32 %v101, %v292
    %v343 = vadd.f32 %v102, %v295
    %v344 = vadd.f32 %v103, %v300
    %v345 = vadd.f32 %v104, %v303
    %v346 = vadd.f32 %v105, %v308
    %v347 = vadd.f32 %v106, %v311
    %v348 = vadd.f32 %v107, %v316
    %v349 = vadd.f32 %v108, %v319
    %v350 = vadd.f32 %v109, %v324
    %v351 = vadd.f32 %v110, %v327
    %v352 = vadd.f32 %v111, %v332
    %v353 = vadd.f32 %v112, %v335
    %354 = vst [vmem:[#allocation2] sm:$0xff] %v338
    %355 = vst [vmem:[#allocation2 + $0x8] sm:$0xff] %v339
    %356 = vst [vmem:[#allocation2 + $0x10] sm:$0xff] %v340
    %357 = vst [vmem:[#allocation2 + $0x18] sm:$0xff] %v341
    %358 = vst [vmem:[#allocation2 + $0x20] sm:$0xff] %v342
    %359 = vst [vmem:[#allocation2 + $0x28] sm:$0xff] %v343
    %360 = vst [vmem:[#allocation2 + $0x30] sm:$0xff] %v344
    %361 = vst [vmem:[#allocation2 + $0x38] sm:$0xff] %v345
    %362 = vst [vmem:[#allocation2 + $0x40] sm:$0xff] %v346
    %363 = vst [vmem:[#allocation2 + $0x48] sm:$0xff] %v347
    %364 = vst [vmem:[#allocation2 + $0x50] sm:$0xff] %v348
    %365 = vst [vmem:[#allocation2 + $0x58] sm:$0xff] %v349
    %366 = vst [vmem:[#allocation2 + $0x60] sm:$0xff] %v350
    %367 = vst [vmem:[#allocation2 + $0x68] sm:$0xff] %v351
    %368 = vst [vmem:[#allocation2 + $0x70] sm:$0xff] %v352
    %369 = vst [vmem:[#allocation2 + $0x78] sm:$0xff] %v353
    // Predicated region
    $region42: #{tpu_custom_call.1} parent=1 // pred_check
      %p370 = pneg %p77
    $region43: #{tpu_custom_call.1} parent=1 // pred_check_branch
      %372 = sbr.rel (%p370) target = $region45
    $region44: #{tpu_custom_call.1} parent=1 // pred_region
      %v373 = vld [vmem:[#allocation2] sm:$0xff]
      %v374 = vld [vmem:[#allocation2 + $0x8] sm:$0xff]
      %v375 = vld [vmem:[#allocation2 + $0x10] sm:$0xff]
      %v376 = vld [vmem:[#allocation2 + $0x18] sm:$0xff]
      %v377 = vld [vmem:[#allocation2 + $0x20] sm:$0xff]
      %v378 = vld [vmem:[#allocation2 + $0x28] sm:$0xff]
      %v379 = vld [vmem:[#allocation2 + $0x30] sm:$0xff]
      %v380 = vld [vmem:[#allocation2 + $0x38] sm:$0xff]
      %v381 = vld [vmem:[#allocation2 + $0x40] sm:$0xff]
      %v382 = vld [vmem:[#allocation2 + $0x48] sm:$0xff]
      %v383 = vld [vmem:[#allocation2 + $0x50] sm:$0xff]
      %v384 = vld [vmem:[#allocation2 + $0x58] sm:$0xff]
      %v385 = vld [vmem:[#allocation2 + $0x60] sm:$0xff]
      %v386 = vld [vmem:[#allocation2 + $0x68] sm:$0xff]
      %v387 = vld [vmem:[#allocation2 + $0x70] sm:$0xff]
      %v388 = vld [vmem:[#allocation2 + $0x78] sm:$0xff]
      %v389 = vpack.c.bf16 %v374, %v373
      %v390 = vpack.c.bf16 %v376, %v375
      %v391 = vpack.c.bf16 %v378, %v377
      %v392 = vpack.c.bf16 %v380, %v379
      %v393 = vpack.c.bf16 %v382, %v381
      %v394 = vpack.c.bf16 %v384, %v383
      %v395 = vpack.c.bf16 %v386, %v385
      %v396 = vpack.c.bf16 %v388, %v387
      %v397 = vld [vmem:[#allocation8] sm:$0xf]
      %v398 = vld [vmem:[#allocation8 + $0x4] sm:$0xf]
      %v399 = vld [vmem:[#allocation8 + $0x8] sm:$0xf]
      %v400 = vld [vmem:[#allocation8 + $0xc] sm:$0xf]
      %v401 = vld [vmem:[#allocation8 + $0x10] sm:$0xf]
      %v402 = vld [vmem:[#allocation8 + $0x14] sm:$0xf]
      %v403 = vld [vmem:[#allocation8 + $0x18] sm:$0xf]
      %v404 = vld [vmem:[#allocation8 + $0x1c] sm:$0xf]
      %v405 = vld [vmem:[#allocation8 + $0x20] sm:$0xf]
      %v406 = vld [vmem:[#allocation8 + $0x24] sm:$0xf]
      %v407 = vld [vmem:[#allocation8 + $0x28] sm:$0xf]
      %v408 = vld [vmem:[#allocation8 + $0x2c] sm:$0xf]
      %v409 = vld [vmem:[#allocation8 + $0x30] sm:$0xf]
      %v410 = vld [vmem:[#allocation8 + $0x34] sm:$0xf]
      %v411 = vld [vmem:[#allocation8 + $0x38] sm:$0xf]
      %v412 = vld [vmem:[#allocation8 + $0x3c] sm:$0xf]
      %v413 = vld [vmem:[%s3] sm:$0x1]
      %v415 = vlaneseq
      %v416 = vshrl.u32 %v415, 7
      %v417 = vsub.s32 0, %v416
      %v418 = vrot.slane %v413, %v417
      %v436 = vunpack.c.l.b16 %v397
      %v437 = vunpack.c.l.b16 %v398
      %v438 = vunpack.c.l.b16 %v399
      %v439 = vunpack.c.l.b16 %v400
      %v440 = vunpack.c.l.b16 %v401
      %v441 = vunpack.c.l.b16 %v402
      %v442 = vunpack.c.l.b16 %v403
      %v443 = vunpack.c.l.b16 %v404
      %v444 = vunpack.c.l.b16 %v405
      %v445 = vunpack.c.l.b16 %v406
      %v446 = vunpack.c.l.b16 %v407
      %v447 = vunpack.c.l.b16 %v408
      %v448 = vunpack.c.l.b16 %v409
      %v449 = vunpack.c.l.b16 %v410
      %v450 = vunpack.c.l.b16 %v411
      %v451 = vunpack.c.l.b16 %v412
      %v452 = vpack.c.b16 %v437, %v436
      %v453 = vpack.c.b16 %v439, %v438
      %v454 = vpack.c.b16 %v441, %v440
      %v455 = vpack.c.b16 %v443, %v442
      %v456 = vpack.c.b16 %v445, %v444
      %v457 = vpack.c.b16 %v447, %v446
      %v458 = vpack.c.b16 %v449, %v448
      %v459 = vpack.c.b16 %v451, %v450
      %468 = vmatprep.subr.bf16.mxu0 0
      %469 = vmatpush1.bf16.msra.mxu0 %v452
      %470 = vmatprep.subr.bf16.mxu0 0
      %471 = vmatpush1.bf16.msra.mxu0 %v453
      %472 = vmatprep.subr.bf16.mxu0 0
      %473 = vmatpush1.bf16.msra.mxu0 %v454
      %474 = vmatprep.subr.bf16.mxu0 0
      %475 = vmatpush1.bf16.msra.mxu0 %v455
      %476 = vmatprep.subr.bf16.mxu0 0
      %477 = vmatpush1.bf16.msra.mxu0 %v456
      %478 = vmatprep.subr.bf16.mxu0 0
      %479 = vmatpush1.bf16.msra.mxu0 %v457
      %480 = vmatprep.subr.bf16.mxu0 0
      %481 = vmatpush1.bf16.msra.mxu0 %v458
      %482 = vmatprep.subr.bf16.mxu0 0
      %483 = vmatpush1.bf16.msra.mxu0 %v459
      %484 = vmatprep.subr.bf16.mxu0 0
      %485 = vmatpush1.bf16.msra.mxu0 0
      %486 = vmatprep.subr.bf16.mxu0 0
      %487 = vmatpush1.bf16.msra.mxu0 0
      %488 = vmatprep.subr.bf16.mxu0 0
      %489 = vmatpush1.bf16.msra.mxu0 0
      %490 = vmatprep.subr.bf16.mxu0 0
      %491 = vmatpush1.bf16.msra.mxu0 0
      %492 = vmatprep.subr.bf16.mxu0 0
      %493 = vmatpush1.bf16.msra.mxu0 0
      %494 = vmatprep.subr.bf16.mxu0 0
      %495 = vmatpush1.bf16.msra.mxu0 0
      %496 = vmatprep.subr.bf16.mxu0 0
      %497 = vmatpush1.bf16.msra.mxu0 0
      %498 = vmatprep.subr.bf16.mxu0 0
      %499 = vmatpush1.bf16.msra.mxu0 0
      %500 = vmatprep.mubr.bf16.mxu0 0
      %501 = vmatmul.mubr.bf16.gmra.mrb[0].mxu0 %v389
      %v502 = vpop.f32.mrb[0].mxu0
      %v503 = vadd.f32 %v418, %v502
      %v504 = vpop.f32.mrb[0].mxu0
      %v505 = vpop.f32.mrb[0].mxu0
      %v506 = vadd.f32 %v418, %v505
      %v507 = vpop.f32.mrb[0].mxu0
      %508 = vmatprep.mubr.bf16.mxu0 0
      %509 = vmatmul.mubr.bf16.gmra.mrb[0].mxu0 %v390
      %v510 = vpop.f32.mrb[0].mxu0
      %v511 = vadd.f32 %v418, %v510
      %v512 = vpop.f32.mrb[0].mxu0
      %v513 = vpop.f32.mrb[0].mxu0
      %v514 = vadd.f32 %v418, %v513
      %v515 = vpop.f32.mrb[0].mxu0
      %516 = vmatprep.mubr.bf16.mxu0 0
      %517 = vmatmul.mubr.bf16.gmra.mrb[0].mxu0 %v391
      %v518 = vpop.f32.mrb[0].mxu0
      %v519 = vadd.f32 %v418, %v518
      %v520 = vpop.f32.mrb[0].mxu0
      %v521 = vpop.f32.mrb[0].mxu0
      %v522 = vadd.f32 %v418, %v521
      %v523 = vpop.f32.mrb[0].mxu0
      %524 = vmatprep.mubr.bf16.mxu0 0
      %525 = vmatmul.mubr.bf16.gmra.mrb[0].mxu0 %v392
      %v526 = vpop.f32.mrb[0].mxu0
      %v527 = vadd.f32 %v418, %v526
      %v528 = vpop.f32.mrb[0].mxu0
      %v529 = vpop.f32.mrb[0].mxu0
      %v530 = vadd.f32 %v418, %v529
      %v531 = vpop.f32.mrb[0].mxu0
      %532 = vmatprep.mubr.bf16.mxu0 0
      %533 = vmatmul.mubr.bf16.gmra.mrb[0].mxu0 %v393
      %v534 = vpop.f32.mrb[0].mxu0
      %v535 = vadd.f32 %v418, %v534
      %v536 = vpop.f32.mrb[0].mxu0
      %v537 = vpop.f32.mrb[0].mxu0
      %v538 = vadd.f32 %v418, %v537
      %v539 = vpop.f32.mrb[0].mxu0
      %540 = vmatprep.mubr.bf16.mxu0 0
      %541 = vmatmul.mubr.bf16.gmra.mrb[0].mxu0 %v394
      %v542 = vpop.f32.mrb[0].mxu0
      %v543 = vadd.f32 %v418, %v542
      %v544 = vpop.f32.mrb[0].mxu0
      %v545 = vpop.f32.mrb[0].mxu0
      %v546 = vadd.f32 %v418, %v545
      %v547 = vpop.f32.mrb[0].mxu0
      %548 = vmatprep.mubr.bf16.mxu0 0
      %549 = vmatmul.mubr.bf16.gmra.mrb[0].mxu0 %v395
      %v550 = vpop.f32.mrb[0].mxu0
      %v551 = vadd.f32 %v418, %v550
      %v552 = vpop.f32.mrb[0].mxu0
      %v553 = vpop.f32.mrb[0].mxu0
      %v554 = vadd.f32 %v418, %v553
      %v555 = vpop.f32.mrb[0].mxu0
      %556 = vmatprep.mubr.bf16.mxu0 0
      %557 = vmatmul.mubr.bf16.gmra.mrb[0].mxu0 %v396
      %v558 = vpop.f32.mrb[0].mxu0
      %v559 = vadd.f32 %v418, %v558
      %v560 = vpop.f32.mrb[0].mxu0
      %v561 = vpop.f32.mrb[0].mxu0
      %v562 = vadd.f32 %v418, %v561
      %v563 = vpop.f32.mrb[0].mxu0
      %564 = vdwg.mxu0
      %v565 = vmax.f32 %v503, 0.0
      %v566 = vmax.f32 %v506, 0.0
      %v567 = vmax.f32 %v511, 0.0
      %v568 = vmax.f32 %v514, 0.0
      %v569 = vmax.f32 %v519, 0.0
      %v570 = vmax.f32 %v522, 0.0
      %v571 = vmax.f32 %v527, 0.0
      %v572 = vmax.f32 %v530, 0.0
      %v573 = vmax.f32 %v535, 0.0
      %v574 = vmax.f32 %v538, 0.0
      %v575 = vmax.f32 %v543, 0.0
      %v576 = vmax.f32 %v546, 0.0
      %v577 = vmax.f32 %v551, 0.0
      %v578 = vmax.f32 %v554, 0.0
      %v579 = vmax.f32 %v559, 0.0
      %v580 = vmax.f32 %v562, 0.0
      %v581 = vpack.c.bf16 %v566, %v565
      %v582 = vpack.c.bf16 %v568, %v567
      %v583 = vpack.c.bf16 %v570, %v569
      %v584 = vpack.c.bf16 %v572, %v571
      %v585 = vpack.c.bf16 %v574, %v573
      %v586 = vpack.c.bf16 %v576, %v575
      %v587 = vpack.c.bf16 %v578, %v577
      %v588 = vpack.c.bf16 %v580, %v579
      %v589 = vld [vmem:[#allocation9] sm:$0xf]
      %v590 = vld [vmem:[#allocation9 + $0x4] sm:$0xf]
      %v591 = vld [vmem:[#allocation9 + $0x8] sm:$0xf]
      %v592 = vld [vmem:[#allocation9 + $0xc] sm:$0xf]
      %v593 = vld [vmem:[#allocation9 + $0x10] sm:$0xf]
      %v594 = vld [vmem:[#allocation9 + $0x14] sm:$0xf]
      %v595 = vld [vmem:[#allocation9 + $0x18] sm:$0xf]
      %v596 = vld [vmem:[#allocation9 + $0x1c] sm:$0xf]
      %v597 = vld [vmem:[#allocation9 + $0x20] sm:$0xf]
      %v598 = vld [vmem:[#allocation9 + $0x24] sm:$0xf]
      %v599 = vld [vmem:[#allocation9 + $0x28] sm:$0xf]
      %v600 = vld [vmem:[#allocation9 + $0x2c] sm:$0xf]
      %v601 = vld [vmem:[#allocation9 + $0x30] sm:$0xf]
      %v602 = vld [vmem:[#allocation9 + $0x34] sm:$0xf]
      %v603 = vld [vmem:[#allocation9 + $0x38] sm:$0xf]
      %v604 = vld [vmem:[#allocation9 + $0x3c] sm:$0xf]
      %v621 = vunpack.c.l.b16 %v589
      %v622 = vunpack.c.l.b16 %v590
      %v623 = vunpack.c.l.b16 %v591
      %v624 = vunpack.c.l.b16 %v592
      %v625 = vunpack.c.l.b16 %v593
      %v626 = vunpack.c.l.b16 %v594
      %v627 = vunpack.c.l.b16 %v595
      %v628 = vunpack.c.l.b16 %v596
      %v629 = vunpack.c.l.b16 %v597
      %v630 = vunpack.c.l.b16 %v598
      %v631 = vunpack.c.l.b16 %v599
      %v632 = vunpack.c.l.b16 %v600
      %v633 = vunpack.c.l.b16 %v601
      %v634 = vunpack.c.l.b16 %v602
      %v635 = vunpack.c.l.b16 %v603
      %v636 = vunpack.c.l.b16 %v604
      %v637 = vpack.c.b16 %v622, %v621
      %v638 = vpack.c.b16 %v624, %v623
      %v639 = vpack.c.b16 %v626, %v625
      %v640 = vpack.c.b16 %v628, %v627
      %v641 = vpack.c.b16 %v630, %v629
      %v642 = vpack.c.b16 %v632, %v631
      %v643 = vpack.c.b16 %v634, %v633
      %v644 = vpack.c.b16 %v636, %v635
      %653 = vmatprep.subr.bf16.mxu0 0
      %654 = vmatpush1.bf16.msra.mxu0 %v637
      %655 = vmatprep.subr.bf16.mxu0 0
      %656 = vmatpush1.bf16.msra.mxu0 %v638
      %657 = vmatprep.subr.bf16.mxu0 0
      %658 = vmatpush1.bf16.msra.mxu0 %v639
      %659 = vmatprep.subr.bf16.mxu0 0
      %660 = vmatpush1.bf16.msra.mxu0 %v640
      %661 = vmatprep.subr.bf16.mxu0 0
      %662 = vmatpush1.bf16.msra.mxu0 %v641
      %663 = vmatprep.subr.bf16.mxu0 0
      %664 = vmatpush1.bf16.msra.mxu0 %v642
      %665 = vmatprep.subr.bf16.mxu0 0
      %666 = vmatpush1.bf16.msra.mxu0 %v643
      %667 = vmatprep.subr.bf16.mxu0 0
      %668 = vmatpush1.bf16.msra.mxu0 %v644
      %669 = vmatprep.subr.bf16.mxu0 0
      %670 = vmatpush1.bf16.msra.mxu0 0
      %671 = vmatprep.subr.bf16.mxu0 0
      %672 = vmatpush1.bf16.msra.mxu0 0
      %673 = vmatprep.subr.bf16.mxu0 0
      %674 = vmatpush1.bf16.msra.mxu0 0
      %675 = vmatprep.subr.bf16.mxu0 0
      %676 = vmatpush1.bf16.msra.mxu0 0
      %677 = vmatprep.subr.bf16.mxu0 0
      %678 = vmatpush1.bf16.msra.mxu0 0
      %679 = vmatprep.subr.bf16.mxu0 0
      %680 = vmatpush1.bf16.msra.mxu0 0
      %681 = vmatprep.subr.bf16.mxu0 0
      %682 = vmatpush1.bf16.msra.mxu0 0
      %683 = vmatprep.subr.bf16.mxu0 0
      %684 = vmatpush1.bf16.msra.mxu0 0
      %685 = vmatprep.mubr.bf16.mxu0 0
      %686 = vmatmul.mubr.bf16.gmra.mrb[0].mxu0 %v581
      %v687 = vpop.f32.mrb[0].mxu0
      %v688 = vadd.f32 0.0, %v687
      %v689 = vpop.f32.mrb[0].mxu0
      %v690 = vpop.f32.mrb[0].mxu0
      %v691 = vadd.f32 0.0, %v690
      %v692 = vpop.f32.mrb[0].mxu0
      %693 = vmatprep.mubr.bf16.mxu0 0
      %694 = vmatmul.mubr.bf16.gmra.mrb[0].mxu0 %v582
      %v695 = vpop.f32.mrb[0].mxu0
      %v696 = vadd.f32 0.0, %v695
      %v697 = vpop.f32.mrb[0].mxu0
      %v698 = vpop.f32.mrb[0].mxu0
      %v699 = vadd.f32 0.0, %v698
      %v700 = vpop.f32.mrb[0].mxu0
      %701 = vmatprep.mubr.bf16.mxu0 0
      %702 = vmatmul.mubr.bf16.gmra.mrb[0].mxu0 %v583
      %v703 = vpop.f32.mrb[0].mxu0
      %v704 = vadd.f32 0.0, %v703
      %v705 = vpop.f32.mrb[0].mxu0
      %v706 = vpop.f32.mrb[0].mxu0
      %v707 = vadd.f32 0.0, %v706
      %v708 = vpop.f32.mrb[0].mxu0
      %709 = vmatprep.mubr.bf16.mxu0 0
      %710 = vmatmul.mubr.bf16.gmra.mrb[0].mxu0 %v584
      %v711 = vpop.f32.mrb[0].mxu0
      %v712 = vadd.f32 0.0, %v711
      %v713 = vpop.f32.mrb[0].mxu0
      %v714 = vpop.f32.mrb[0].mxu0
      %v715 = vadd.f32 0.0, %v714
      %v716 = vpop.f32.mrb[0].mxu0
      %717 = vmatprep.mubr.bf16.mxu0 0
      %718 = vmatmul.mubr.bf16.gmra.mrb[0].mxu0 %v585
      %v719 = vpop.f32.mrb[0].mxu0
      %v720 = vadd.f32 0.0, %v719
      %v721 = vpop.f32.mrb[0].mxu0
      %v722 = vpop.f32.mrb[0].mxu0
      %v723 = vadd.f32 0.0, %v722
      %v724 = vpop.f32.mrb[0].mxu0
      %725 = vmatprep.mubr.bf16.mxu0 0
      %726 = vmatmul.mubr.bf16.gmra.mrb[0].mxu0 %v586
      %v727 = vpop.f32.mrb[0].mxu0
      %v728 = vadd.f32 0.0, %v727
      %v729 = vpop.f32.mrb[0].mxu0
      %v730 = vpop.f32.mrb[0].mxu0
      %v731 = vadd.f32 0.0, %v730
      %v732 = vpop.f32.mrb[0].mxu0
      %733 = vmatprep.mubr.bf16.mxu0 0
      %734 = vmatmul.mubr.bf16.gmra.mrb[0].mxu0 %v587
      %v735 = vpop.f32.mrb[0].mxu0
      %v736 = vadd.f32 0.0, %v735
      %v737 = vpop.f32.mrb[0].mxu0
      %v738 = vpop.f32.mrb[0].mxu0
      %v739 = vadd.f32 0.0, %v738
      %v740 = vpop.f32.mrb[0].mxu0
      %741 = vmatprep.mubr.bf16.mxu0 0
      %742 = vmatmul.mubr.bf16.gmra.mrb[0].mxu0 %v588
      %v743 = vpop.f32.mrb[0].mxu0
      %v744 = vadd.f32 0.0, %v743
      %v745 = vpop.f32.mrb[0].mxu0
      %v746 = vpop.f32.mrb[0].mxu0
      %v747 = vadd.f32 0.0, %v746
      %v748 = vpop.f32.mrb[0].mxu0
      %749 = vdwg.mxu0
      %v750 = vpack.c.bf16 %v691, %v688
      %v751 = vpack.c.bf16 %v699, %v696
      %v752 = vpack.c.bf16 %v707, %v704
      %v753 = vpack.c.bf16 %v715, %v712
      %v754 = vpack.c.bf16 %v723, %v720
      %v755 = vpack.c.bf16 %v731, %v728
      %v756 = vpack.c.bf16 %v739, %v736
      %v757 = vpack.c.bf16 %v747, %v744
      %v766 = vunpack.c.l.b16 %v750
      %v767 = vunpack.c.h.b16 %v750
      %v768 = vunpack.c.l.b16 %v751
      %v769 = vunpack.c.h.b16 %v751
      %v770 = vunpack.c.l.b16 %v752
      %v771 = vunpack.c.h.b16 %v752
      %v772 = vunpack.c.l.b16 %v753
      %v773 = vunpack.c.h.b16 %v753
      %v774 = vunpack.c.l.b16 %v754
      %v775 = vunpack.c.h.b16 %v754
      %v776 = vunpack.c.l.b16 %v755
      %v777 = vunpack.c.h.b16 %v755
      %v778 = vunpack.c.l.b16 %v756
      %v779 = vunpack.c.h.b16 %v756
      %v780 = vunpack.c.l.b16 %v757
      %v781 = vunpack.c.h.b16 %v757
      %v782 = vpack.c.b16 %v766, %v766
      %v783 = vpack.c.b16 %v767, %v767
      %v784 = vpack.c.b16 %v768, %v768
      %v785 = vpack.c.b16 %v769, %v769
      %v786 = vpack.c.b16 %v770, %v770
      %v787 = vpack.c.b16 %v771, %v771
      %v788 = vpack.c.b16 %v772, %v772
      %v789 = vpack.c.b16 %v773, %v773
      %v790 = vpack.c.b16 %v774, %v774
      %v791 = vpack.c.b16 %v775, %v775
      %v792 = vpack.c.b16 %v776, %v776
      %v793 = vpack.c.b16 %v777, %v777
      %v794 = vpack.c.b16 %v778, %v778
      %v795 = vpack.c.b16 %v779, %v779
      %v796 = vpack.c.b16 %v780, %v780
      %v797 = vpack.c.b16 %v781, %v781
      %814 = vst [vmem:[#allocation11] sm:$0xf] %v782
      %815 = vst [vmem:[#allocation11 + $0x4] sm:$0xf] %v783
      %816 = vst [vmem:[#allocation11 + $0x8] sm:$0xf] %v784
      %817 = vst [vmem:[#allocation11 + $0xc] sm:$0xf] %v785
      %818 = vst [vmem:[#allocation11 + $0x10] sm:$0xf] %v786
      %819 = vst [vmem:[#allocation11 + $0x14] sm:$0xf] %v787
      %820 = vst [vmem:[#allocation11 + $0x18] sm:$0xf] %v788
      %821 = vst [vmem:[#allocation11 + $0x1c] sm:$0xf] %v789
      %822 = vst [vmem:[#allocation11 + $0x20] sm:$0xf] %v790
      %823 = vst [vmem:[#allocation11 + $0x24] sm:$0xf] %v791
      %824 = vst [vmem:[#allocation11 + $0x28] sm:$0xf] %v792
      %825 = vst [vmem:[#allocation11 + $0x2c] sm:$0xf] %v793
      %826 = vst [vmem:[#allocation11 + $0x30] sm:$0xf] %v794
      %827 = vst [vmem:[#allocation11 + $0x34] sm:$0xf] %v795
      %828 = vst [vmem:[#allocation11 + $0x38] sm:$0xf] %v796
      %829 = vst [vmem:[#allocation11 + $0x3c] sm:$0xf] %v797
    $region45: #{tpu_custom_call.1} parent=1 // pred_fallthru
      _
    // Predicated region
    $region46: #{tpu_custom_call.1} parent=1 // pred_check
      _
    $region47: #{tpu_custom_call.1} parent=1 // pred_check_branch
      %831 = sbr.rel (0) target = $region49
    $region48: #{tpu_custom_call.1} parent=1 // pred_region
      %s833 = ssub.s32 1024, 1024
      %834 = vsyncadd [#allocation5], %s833
      %s835 = sshll.u32 [#allocation11], 4
      %s836 = int_to_ptr.vmem [resolvable:$true] %s835
      %841 = dma.vmem_to_hbm [thread:$0]  %s836, 1024, %s5, [#allocation5], 64, 64, 4
    $region49: #{tpu_custom_call.1} parent=1 // pred_fallthru
      _
    // Predicated region
    $region50: #{tpu_custom_call.1} parent=1 // pred_check
      _
    $region51: #{tpu_custom_call.1} parent=1 // pred_check_branch
      %843 = sbr.rel (0) target = $region53
    $region52: #{tpu_custom_call.1} parent=1 // pred_region
      %844 = dma.done [#allocation5], 1024
    $region53: #{tpu_custom_call.1} parent=1 // pred_fallthru
      _
    %845 = vsyncpa [#allocation4], 1
    %846 = vsyncpa [#allocation7], 1
    %847 = vsyncpa [#allocation10], 1
    %848 = vsyncpa [#allocation5], 1

</llo_original>
